<compile_context>
chip_gen: v5e
topology: v5e:2x2
jax: 0.10.0
libtpu: 0.0.40
codegen_flags: <defaults>
</compile_context>

<pallas_src>
import functools

import jax
import jax.numpy as jnp
from jax import lax
from jax.experimental import pallas as pl
from jax.experimental.pallas import tpu as pltpu

LANES = 128                # hardware lane width (last dim of every block)
DEFAULT_BLOCK_ROWS = 8192  # sublane rows per block; 4 MiB f32 per input block


def _tensorcore_count():
    """2 TensorCores per chip on v7x; 1 on v5e/v6e. Best-effort detection."""
    try:
        kind = jax.devices()[0].device_kind.lower()
    except Exception:
        return 1
    return 2 if ("v7" in kind or "7x" in kind) else 1


def _content_loss_kernel(x_ref, t_ref, loss_ref, *, rows, block_rows, per_core,
                         needs_mask):
    """Accumulate per-lane partial sums of (x - t)^2 into a resident (8,128) block."""
    i = pl.program_id(1)  # reduction step within this core's slice of tiles

    @pl.when(i == 0)
    def _init():
        loss_ref[...] = jnp.zeros_like(loss_ref)

    # Native-dtype loads, f32 math (casts are free in a DMA-bound kernel).
    x = x_ref[...].astype(jnp.float32)
    t = t_ref[...].astype(jnp.float32)
    d = x - t

    def accumulate(dd):
        sq = dd * dd
        # (block_rows,128) -> (block_rows//8, 8, 128): pure sublane-split view
        # of the physical layout; the axis-0 sum is elementwise vreg adds (VPU).
        loss_ref[...] += jnp.sum(sq.reshape(block_rows // 8, 8, LANES), axis=0)

    if needs_mask:
        # Only partial (last real) and phantom (odd-split, clamped) tiles pay
        # the iota/compare/select; full tiles take the unmasked fast path.
        tile_idx = pl.program_id(0) * per_core + i
        is_full = (tile_idx + 1) * block_rows <= rows

        @pl.when(is_full)
        def _fast():
            accumulate(d)

        @pl.when(jnp.logical_not(is_full))
        def _masked():
            local_row = lax.broadcasted_iota(jnp.int32, d.shape, 0)
            keep = (tile_idx * block_rows + local_row) < rows
            # Mask before squaring: garbage / NaN rows of a partial block and
            # whole phantom tiles contribute exactly 0.
            accumulate(jnp.where(keep, d, 0.0))
    else:
        accumulate(d)


def content_loss_forward(x, target, weight):
    """Returns (output, loss).

    output = x (pass-through);  loss = mean((x*weight - target*weight)^2),
    which equals the PyTorch module's MSELoss(input*weight, target.detach()*weight).
    """
    n_elems = x.size
    w2 = float(weight) * float(weight)

    x_flat = x.reshape(-1)
    t_flat = target.reshape(-1)

    rows = n_elems // LANES
    n_main = rows * LANES

    # Tiny arrays: not worth a kernel launch, just do it in plain JAX.
    if rows < 8:
        d = x_flat.astype(jnp.float32) - t_flat.astype(jnp.float32)
        return x, (w2 * jnp.sum(d * d)) / n_elems

    # Non-lane-aligned tail (<128 elements): fold into the scalar in plain JAX
    # instead of materializing padded copies of both arrays.
    tail_sum = None
    if n_main != n_elems:
        xt = x_flat[n_main:].astype(jnp.float32)
        tt = t_flat[n_main:].astype(jnp.float32)
        dt = xt - tt
        tail_sum = jnp.sum(dt * dt)
        x_flat = x_flat[:n_main]
        t_flat = t_flat[:n_main]

    x2 = x_flat.reshape(rows, LANES)
    t2 = t_flat.reshape(rows, LANES)

    # Block rows: as large as possible, multiple of 8, never exceeding `rows`.
    block_rows = min(DEFAULT_BLOCK_ROWS, (rows // 8) * 8)
    n_tiles = -(-rows // block_rows)  # ceil-div

    # v7x: always split the tiles across both TensorCores (phantom tiles are
    # clamped in the index_map and zeroed by the row mask).  1 on v5e/v6e.
    nc = _tensorcore_count() if n_tiles >= 2 else 1
    per_core = -(-n_tiles // nc)
    has_phantom = nc * per_core != n_tiles
    needs_mask = (rows % block_rows != 0) or has_phantom

    if has_phantom:
        last_tile = n_tiles - 1
        in_index_map = lambda c, i: (jnp.minimum(c * per_core + i, last_tile), 0)
    else:
        in_index_map = lambda c, i: (c * per_core + i, 0)

    kernel = functools.partial(
        _content_loss_kernel,
        rows=rows,
        block_rows=block_rows,
        per_core=per_core,
        needs_mask=needs_mask,
    )

    if nc > 1:
        dim_sem = (pltpu.CORE_PARALLEL, pltpu.ARBITRARY)
    else:
        dim_sem = ("arbitrary", "arbitrary")

    bytes_accessed = (rows * LANES * (x.dtype.itemsize + target.dtype.itemsize)
                      + nc * 8 * LANES * 4)
    cost = pl.CostEstimate(flops=3 * rows * LANES, transcendentals=0,
                           bytes_accessed=bytes_accessed)

    partials = pl.pallas_call(
        kernel,
        # One vreg-shaped partial-sum block per core; summed in the wrapper.
        out_shape=jax.ShapeDtypeStruct((nc * 8, LANES), jnp.float32),
        grid_spec=pltpu.PrefetchScalarGridSpec(
            num_scalar_prefetch=0,
            grid=(nc, per_core),
            in_specs=[
                pl.BlockSpec((block_rows, LANES), in_index_map),
                pl.BlockSpec((block_rows, LANES), in_index_map),
            ],
            # Output block depends only on the core index -> resident
            # accumulator across the "arbitrary" reduction axis.
            out_specs=pl.BlockSpec((8, LANES), lambda c, i: (c, 0)),
        ),
        compiler_params=pltpu.CompilerParams(
            dimension_semantics=dim_sem,
            vmem_limit_bytes=40 << 20,  # 2 inputs x 2 bufs x 4 MiB + headroom
        ),
        cost_estimate=cost,
    )(x2, t2)

    total = jnp.sum(partials)
    if tail_sum is not None:
        total = total + tail_sum
    loss = (w2 * total) / n_elems
    # self.output = input: return the input array itself, no HBM round-trip.
    return x, loss


if __name__ == "__main__":
    key = jax.random.PRNGKey(0)
    k_x, k_t, k_x2, k_t2 = jax.random.split(key, 4)
    weight = 0.75

    # Test 1: small NCHW feature map, as produced by an upstream conv layer.
    x = jax.random.normal(k_x, (2, 4, 16, 16), dtype=jnp.float32)
    target = jax.random.normal(k_t, (2, 4, 16, 16), dtype=jnp.float32)

    out, loss = content_loss_forward(x, target, weight)
    out, loss = jax.block_until_ready((out, loss))

    target_scaled = target * weight  # what the PyTorch module stores in __init__
    ref_loss = jnp.mean((x * weight - target_scaled) ** 2)
    assert jnp.allclose(out, x), "output must be a pass-through of input"
    assert jnp.allclose(loss, ref_loss, rtol=1e-5, atol=1e-6), (loss, ref_loss)

    # Test 2: ragged element count -> exercises partial-tile mask + <128 tail.
    x_r = jax.random.normal(k_x2, (3, 5, 7, 11), dtype=jnp.float32)
    t_r = jax.random.normal(k_t2, (3, 5, 7, 11), dtype=jnp.float32)
    out_r, loss_r = content_loss_forward(x_r, t_r, weight)
    out_r, loss_r = jax.block_until_ready((out_r, loss_r))
    ref_r = jnp.mean((x_r * weight - t_r * weight) ** 2)
    assert jnp.allclose(out_r, x_r)
    assert jnp.allclose(loss_r, ref_r, rtol=1e-5, atol=1e-6), (loss_r, ref_r)

    print("KERNEL_OK")
</pallas_src>

<mosaic_0001>
module attributes {stable_mosaic.version = 11 : i64} {
  func.func @_content_loss_kernel(%arg0: i32, %arg1: i32, %arg2: memref<16x128xf32, #tpu.memory_space<vmem>>, %arg3: memref<16x128xf32, #tpu.memory_space<vmem>>, %arg4: memref<8x128xf32, #tpu.memory_space<vmem>>) attributes {dimension_semantics = [#tpu.dimension_semantics<arbitrary>, #tpu.dimension_semantics<arbitrary>], iteration_bounds = array<i64: 1, 1>, scalar_prefetch = 0 : i64, scratch_operands = 0 : i64, tpu.core_type = #tpu.core_type<tc>, window_params = [{transform_indices = @transform_0, window_bounds = array<i64: 16, 128>}, {transform_indices = @transform_1, window_bounds = array<i64: 16, 128>}, {transform_indices = @transform_2, window_bounds = array<i64: 8, 128>}]} {
    %c0_i32 = arith.constant 0 : i32
    %0 = arith.cmpi eq, %arg1, %c0_i32 : i32
    %1 = arith.extui %0 : i1 to i32
    %c0_i32_0 = arith.constant 0 : i32
    %2 = arith.cmpi ne, %1, %c0_i32_0 : i32
    scf.if %2 {
      %cst_8 = arith.constant 0.000000e+00 : f32
      %12 = vector.broadcast %cst_8 : f32 to vector<8x128xf32>
      %c0_9 = arith.constant 0 : index
      %c0_10 = arith.constant 0 : index
      %13 = vector.load %arg4[%c0_9, %c0_10] : memref<8x128xf32, #tpu.memory_space<vmem>>, vector<8x128xf32>
      tpu.vector_store %arg4[%c0_9, %c0_10], %12 {strides = array<i32>} : memref<8x128xf32, #tpu.memory_space<vmem>>, vector<8x128xf32>,
    } else {
    }
    %c0 = arith.constant 0 : index
    %c0_1 = arith.constant 0 : index
    %3 = vector.load %arg2[%c0, %c0_1] : memref<16x128xf32, #tpu.memory_space<vmem>>, vector<16x128xf32>
    %c0_2 = arith.constant 0 : index
    %c0_3 = arith.constant 0 : index
    %4 = vector.load %arg3[%c0_2, %c0_3] : memref<16x128xf32, #tpu.memory_space<vmem>>, vector<16x128xf32>
    %5 = arith.subf %3, %4 : vector<16x128xf32>
    %6 = arith.mulf %5, %5 : vector<16x128xf32>
    %c0_4 = arith.constant 0 : index
    %c0_5 = arith.constant 0 : index
    %7 = vector.load %arg4[%c0_4, %c0_5] : memref<8x128xf32, #tpu.memory_space<vmem>>, vector<8x128xf32>
    %8 = vector.shape_cast %6 : vector<16x128xf32> to vector<2x8x128xf32>
    %cst = arith.constant dense<0.000000e+00> : vector<8x128xf32>
    %9 = vector.multi_reduction <add>, %8, %cst [0] : vector<2x8x128xf32> to vector<8x128xf32>
    %10 = arith.addf %7, %9 : vector<8x128xf32>
    %c0_6 = arith.constant 0 : index
    %c0_7 = arith.constant 0 : index
    %11 = vector.load %arg4[%c0_6, %c0_7] : memref<8x128xf32, #tpu.memory_space<vmem>>, vector<8x128xf32>
    tpu.vector_store %arg4[%c0_6, %c0_7], %10 {strides = array<i32>} : memref<8x128xf32, #tpu.memory_space<vmem>>, vector<8x128xf32>,
    return
  }
  func.func @transform_0(%arg0: i32, %arg1: i32) -> (i32, i32) {
    %c1_i32 = arith.constant 1 : i32
    %0 = arith.muli %arg0, %c1_i32 : i32
    %1 = arith.addi %0, %arg1 : i32
    %c0_i32 = arith.constant 0 : i32
    %c0_i32_0 = arith.constant 0 : i32
    return %1, %c0_i32 : i32, i32
  }
  func.func @transform_1(%arg0: i32, %arg1: i32) -> (i32, i32) {
    %c1_i32 = arith.constant 1 : i32
    %0 = arith.muli %arg0, %c1_i32 : i32
    %1 = arith.addi %0, %arg1 : i32
    %c0_i32 = arith.constant 0 : i32
    %c0_i32_0 = arith.constant 0 : i32
    return %1, %c0_i32 : i32, i32
  }
  func.func @transform_2(%arg0: i32, %arg1: i32) -> (i32, i32) {
    %c0_i32 = arith.constant 0 : i32
    %c0_i32_0 = arith.constant 0 : i32
    return %arg0, %c0_i32 : i32, i32
  }
}

</mosaic_0001>

<llo_original>
// kernel: tpu_custom_call.1
$region0: #{tpu_custom_call.1}
  #allocation0 [shape = 'u32[]', space=smem, size = 0x4, offset = 0x4, fixed_abs, tag = 'smem constant byte address 0x4 - core index']
  #allocation1 [shape = 'u32[72,128]{1,0:T(1,128)}', space=vmem, size = 0x9000, scoped, tag = 'internal scratch']
  %s0 = inlined_call_operand.hbm [shape: f32[16,128], index: 0, kind: input, shape index: {}]
  %s1 = inlined_call_operand.hbm [shape: f32[16,128], index: 1, kind: input, shape index: {}]
  %s2 = inlined_call_operand.hbm [shape: f32[8,128], index: 2, kind: output, shape index: {}]
  %s3 = sld [smem:[#allocation0]]
  $region30: #{tpu_custom_call.1} parent=0
    _
  %s5 = ssub.s32 1, %s3
  %s6 = scalar_select 0, %s5, %s3
  $region1: #{tpu_custom_call.1} parent=0
    #allocation2 [shape = 'u8[8192]{0}', space=vmem, size = 0x2000, scoped, tag = 'input window, operand 0, single buffered']
    #allocation3 [shape = 's32[1]{0}', space=sflag, size = 0x4, scoped, tag = 'scoped memory for tpu_custom_call.1']
    #allocation4 [shape = 's32[1]{0}', space=sflag, size = 0x4, scoped, tag = 'scoped memory for tpu_custom_call.1']
    #allocation5 [shape = 'u8[8192]{0}', space=vmem, size = 0x2000, scoped, tag = 'input window, operand 1, single buffered']
    #allocation6 [shape = 's32[1]{0}', space=sflag, size = 0x4, scoped, tag = 'scoped memory for tpu_custom_call.1']
    #allocation7 [shape = 'u8[4096]{0}', space=vmem, size = 0x1000, scoped, tag = 'output window, operand 0, single buffered']
    %7 = vsyncpa [#allocation3], 0
    %8 = vsyncpa [#allocation6], 0
    %9 = vsyncpa [#allocation4], 0
    // Predicated region
    $region2: #{tpu_custom_call.1} parent=1 // pred_check
      _
    $region3: #{tpu_custom_call.1} parent=1 // pred_check_branch
      %11 = sbr.rel (0) target = $region5
    $region4: #{tpu_custom_call.1} parent=1 // pred_region
      %s12 = sadd.s32 0, 0
      %s13 = smul.u32 2, %s12
      %15 = vsyncadd [#allocation3], 0
      %s16 = smul.addr %s13, 8
      %s17 = scalar_lea.hbm %s0, %s16
      %s18 = sshll.u32 %s17, 4
      %s19 = int_to_ptr.hbm [resolvable:$true] %s18
      %s20 = sshll.u32 [#allocation2], 4
      %s21 = int_to_ptr.vmem [resolvable:$true] %s20
      %26 = dma.hbm_to_vmem [thread:$0]  %s19, 256, %s21, [#allocation3], 128, 128, 8
    $region5: #{tpu_custom_call.1} parent=1 // pred_fallthru
      _
    // Predicated region
    $region6: #{tpu_custom_call.1} parent=1 // pred_check
      _
    $region7: #{tpu_custom_call.1} parent=1 // pred_check_branch
      %28 = sbr.rel (0) target = $region9
    $region8: #{tpu_custom_call.1} parent=1 // pred_region
      %s29 = sadd.s32 0, 0
      %s30 = smul.u32 2, %s29
      %32 = vsyncadd [#allocation6], 0
      %s33 = smul.addr %s30, 8
      %s34 = scalar_lea.hbm %s1, %s33
      %s35 = sshll.u32 %s34, 4
      %s36 = int_to_ptr.hbm [resolvable:$true] %s35
      %s37 = sshll.u32 [#allocation5], 4
      %s38 = int_to_ptr.vmem [resolvable:$true] %s37
      %43 = dma.hbm_to_vmem [thread:$0]  %s36, 256, %s38, [#allocation6], 128, 128, 8
    $region9: #{tpu_custom_call.1} parent=1 // pred_fallthru
      _
    // Predicated region
    $region10: #{tpu_custom_call.1} parent=1 // pred_check
      _
    $region11: #{tpu_custom_call.1} parent=1 // pred_check_branch
      %45 = sbr.rel (0) target = $region13
    $region12: #{tpu_custom_call.1} parent=1 // pred_region
      %47 = dma.done [#allocation3], 256
    $region13: #{tpu_custom_call.1} parent=1 // pred_fallthru
      _
    // Predicated region
    $region14: #{tpu_custom_call.1} parent=1 // pred_check
      _
    $region15: #{tpu_custom_call.1} parent=1 // pred_check_branch
      %49 = sbr.rel (0) target = $region17
    $region16: #{tpu_custom_call.1} parent=1 // pred_region
      %51 = dma.done [#allocation6], 256
    $region17: #{tpu_custom_call.1} parent=1 // pred_fallthru
      _
    %s52 = sadd.s32 0, 0
    %s53 = smul.u32 2, %s52
    %s54 = sadd.s32 0, 0
    %s55 = smul.u32 2, %s54
    %p56 = scmp.eq.s32.totalorder 0, 0
    // Predicated region
    $region18: #{tpu_custom_call.1} parent=1 // pred_check
      %p57 = pneg %p56
    $region19: #{tpu_custom_call.1} parent=1 // pred_check_branch
      %59 = sbr.rel (%p57) target = $region21
    $region20: #{tpu_custom_call.1} parent=1 // pred_region
      %60 = vst [vmem:[#allocation7] sm:$0xff] 0.0
    $region21: #{tpu_custom_call.1} parent=1 // pred_fallthru
      _
    %v61 = vld [vmem:[#allocation2] sm:$0xff]
    %v62 = vld [vmem:[#allocation2 + $0x8] sm:$0xff]
    %v63 = vld [vmem:[#allocation5] sm:$0xff]
    %v64 = vld [vmem:[#allocation5 + $0x8] sm:$0xff]
    %v65 = vsub.f32 %v61, %v63
    %v66 = vsub.f32 %v62, %v64
    %v67 = vmul.f32 %v65, %v65
    %v68 = vmul.f32 %v66, %v66
    %v69 = vld [vmem:[#allocation7] sm:$0xff]
    %v70 = vadd.f32 %v67, %v68
    %v71 = vadd.f32 %v69, %v70
    %72 = vst [vmem:[#allocation7] sm:$0xff] %v71
    // Predicated region
    $region22: #{tpu_custom_call.1} parent=1 // pred_check
      _
    $region23: #{tpu_custom_call.1} parent=1 // pred_check_branch
      %74 = sbr.rel (0) target = $region25
    $region24: #{tpu_custom_call.1} parent=1 // pred_region
      %76 = vsyncadd [#allocation4], 0
      %s78 = sshll.u32 [#allocation7], 4
      %s79 = int_to_ptr.vmem [resolvable:$true] %s78
      %s80 = sshll.u32 %s2, 4
      %s81 = int_to_ptr.hbm [resolvable:$true] %s80
      %83 = dma.vmem_to_hbm [thread:$0]  %s79, 128, %s81, [#allocation4]
    $region25: #{tpu_custom_call.1} parent=1 // pred_fallthru
      _
    // Predicated region
    $region26: #{tpu_custom_call.1} parent=1 // pred_check
      _
    $region27: #{tpu_custom_call.1} parent=1 // pred_check_branch
      %85 = sbr.rel (0) target = $region29
    $region28: #{tpu_custom_call.1} parent=1 // pred_region
      %87 = dma.done [#allocation4], 128
    $region29: #{tpu_custom_call.1} parent=1 // pred_fallthru
      _
    %88 = vsyncpa [#allocation3], 1
    %89 = vsyncpa [#allocation6], 1
    %90 = vsyncpa [#allocation4], 1

</llo_original>
